<compile_context>
chip_gen: v6e
topology: v6e:2x2x1
jax: 0.10.0
libtpu: 0.0.40
codegen_flags: <defaults>
</compile_context>

<pallas_src>
import jax
import jax.numpy as jnp
from jax.experimental import pallas as pl
from jax.experimental.pallas import tpu as pltpu

BN_EPS = 1e-5  # torch.nn.BatchNorm1d default eps


def _round_up(v, m):
    return (v + m - 1) // m * m


def joint_regressor_kernel(x_ref, w1_ref, t_ref, wh_ref, bh_ref, o_ref, acc_ref):
    """One (TM-row, TK-column) step of: relu(fc1_bn(x)) @ W_head + b_head."""
    k = pl.program_id(1)

    @pl.when(k == 0)
    def _():
        acc_ref[...] = jnp.zeros_like(acc_ref)

    # fc1 partial product for this K tile: bf16 (TM, TK) @ (TK, H), f32 accumulation.
    acc_ref[...] += jnp.dot(x_ref[...], w1_ref[...],
                            preferred_element_type=jnp.float32)

    @pl.when(k == pl.num_programs(1) - 1)
    def _():
        # BN scale already folded into w1 columns; only the shift remains.
        h = jnp.maximum(acc_ref[...] + t_ref[...], 0.0)          # bias/BN shift + ReLU
        h = h.astype(jnp.bfloat16)                               # bf16 feed for the MXU
        # head matmul; output lanes are zero-padded to a multiple of 128 -> unmasked store
        o_ref[...] = (jnp.dot(h, wh_ref[...],
                              preferred_element_type=jnp.float32)
                      + bh_ref[...]).astype(o_ref.dtype)


def joint_regressor_forward(feat, params, *, tm=None, tk=None):
    n, t, j, c = feat.shape
    nt = n * t
    kdim = j * c

    w1 = params['w1'].astype(jnp.float32)          # (K, H)   fc1 weight (in, out)
    b1 = params['b1'].astype(jnp.float32)          # (H,)
    gamma = params['bn1_gamma'].astype(jnp.float32)
    beta = params['bn1_beta'].astype(jnp.float32)
    mean = params['bn1_mean'].astype(jnp.float32)
    var = params['bn1_var'].astype(jnp.float32)
    wh = params['w_head'].astype(jnp.float32)      # (H, J*3) head weight (in, out)
    bh = params['b_head'].astype(jnp.float32)      # (J*3,)

    hdim = w1.shape[1]
    out_dim = wh.shape[1]

    # Fold fc1 bias + BatchNorm (eval mode):
    #   bn(x@w1 + b1) = x @ (w1*scale) + shift
    inv_std = jax.lax.rsqrt(var + BN_EPS)
    scale = gamma * inv_std                                       # (H,)
    shift = ((b1 - mean) * scale + beta).reshape(1, hdim)         # (1, H)  f32
    w1_folded = w1 * scale[None, :]                               # scale folded into fc1

    # ---- Tile selection (no full-extent fallback; pad instead) -------------------
    if tm is None:
        tm = 512
        # keep at least 2 row tiles so both v7x TensorCores get work
        while tm > 8 and _round_up(nt, tm) // tm < 2:
            tm //= 2
    tm = max(8, _round_up(tm, 8))
    if tk is None:
        tk = min(1024, _round_up(kdim, 128))
    tk = max(128, _round_up(tk, 128))

    nt_pad = _round_up(nt, tm)
    k_pad = _round_up(kdim, tk)
    out_pad = _round_up(out_dim, 128)              # lane-dense (unmasked) output store

    # ---- bf16 operands (zero-padded); accumulation stays f32 in-kernel -----------
    x_p = jnp.zeros((nt_pad, k_pad), jnp.bfloat16)
    x_p = x_p.at[:nt, :kdim].set(feat.reshape(nt, kdim).astype(jnp.bfloat16))
    w1_p = jnp.zeros((k_pad, hdim), jnp.bfloat16).at[:kdim, :].set(
        w1_folded.astype(jnp.bfloat16))
    wh_p = jnp.zeros((hdim, out_pad), jnp.bfloat16).at[:, :out_dim].set(
        wh.astype(jnp.bfloat16))
    bh_p = jnp.zeros((1, out_pad), jnp.float32).at[:, :out_dim].set(bh)

    grid = (nt_pad // tm, k_pad // tk)

    # VMEM budget: double-buffered streamed tiles + single-buffered constants + scratch.
    bytes_needed = (
        2 * tm * tk * 2            # x tiles (bf16, double-buffered)
        + 2 * tk * hdim * 2        # w1 tiles (bf16, double-buffered)
        + hdim * 4                 # shift (f32, single-buffered)
        + hdim * out_pad * 2       # head weight (bf16, single-buffered)
        + out_pad * 4              # head bias (f32, single-buffered)
        + 2 * tm * out_pad * 4     # output tiles (f32, double-buffered)
        + tm * hdim * 4            # fc1 accumulator scratch (f32)
    )
    vmem_limit = int(min(96 * 1024 * 1024, max(2 * bytes_needed, 32 * 1024 * 1024)))

    out_padded = pl.pallas_call(
        joint_regressor_kernel,
        out_shape=jax.ShapeDtypeStruct((nt_pad, out_pad), jnp.float32),
        grid=grid,
        in_specs=[
            pl.BlockSpec((tm, tk), lambda i, k: (i, k)),           # x rows / K tile
            pl.BlockSpec((tk, hdim), lambda i, k: (k, 0)),         # fc1 weight K tile
            pl.BlockSpec((1, hdim), lambda i, k: (0, 0),           # BN/bias shift
                         pipeline_mode=pl.Buffered(1)),
            pl.BlockSpec((hdim, out_pad), lambda i, k: (0, 0),     # head weight (padded)
                         pipeline_mode=pl.Buffered(1)),
            pl.BlockSpec((1, out_pad), lambda i, k: (0, 0),        # head bias (padded)
                         pipeline_mode=pl.Buffered(1)),
        ],
        out_specs=pl.BlockSpec((tm, out_pad), lambda i, k: (i, 0)),
        scratch_shapes=[pltpu.VMEM((tm, hdim), jnp.float32)],      # fc1 accumulator
        compiler_params=pltpu.CompilerParams(
            dimension_semantics=("parallel", "arbitrary"),
            vmem_limit_bytes=vmem_limit),
    )(x_p, w1_p, shift, wh_p, bh_p)

    return out_padded[:nt, :out_dim].reshape(n, t, j, 3)


def joint_regressor_reference(feat, params):
    """Pure-JAX f32 reference of the same forward pass (eval-mode BN)."""
    n, t, j, c = feat.shape
    x = feat.reshape(n * t, j * c)
    h = x @ params['w1'] + params['b1']
    inv_std = jax.lax.rsqrt(params['bn1_var'] + BN_EPS)
    h = (h - params['bn1_mean']) * inv_std * params['bn1_gamma'] + params['bn1_beta']
    h = jnp.maximum(h, 0.0)
    out = h @ params['w_head'] + params['b_head']
    return out.reshape(n, t, j, 3)


def init_params(key, num_joints, dim_rep, hidden):
    kdim = num_joints * dim_rep
    out_dim = num_joints * 3
    ks = jax.random.split(key, 8)
    std = 0.02
    return {
        'w1': std * jax.random.normal(ks[0], (kdim, hidden), jnp.float32),
        'b1': std * jax.random.normal(ks[1], (hidden,), jnp.float32),
        'bn1_gamma': 1.0 + 0.1 * jax.random.normal(ks[2], (hidden,), jnp.float32),
        'bn1_beta': 0.1 * jax.random.normal(ks[3], (hidden,), jnp.float32),
        'bn1_mean': 0.1 * jax.random.normal(ks[4], (hidden,), jnp.float32),
        'bn1_var': jnp.abs(1.0 + 0.1 * jax.random.normal(ks[5], (hidden,), jnp.float32)),
        # head_joints: xavier_uniform with gain 0.01 -> very small weights
        'w_head': 0.02 * jax.random.normal(ks[6], (hidden, out_dim), jnp.float32),
        'b_head': std * jax.random.normal(ks[7], (out_dim,), jnp.float32),
    }


if __name__ == "__main__":
    # Small config consistent with JointRegressor: num_joints=16, dim_rep=16,
    # hidden_dim=128, dropout_ratio=0.0; batch N=2, frames T=8.
    n, t, j, c = 2, 8, 16, 16
    hidden = 128

    key = jax.random.PRNGKey(0)
    kx, kp = jax.random.split(key)
    feat = jax.random.normal(kx, (n, t, j, c), jnp.float32)
    params = init_params(kp, j, c, hidden)

    # tm=8, tk=128 exercises both the row-parallel axis (2 tiles) and the
    # K-accumulation axis (2 steps) at this small size.
    out = jax.block_until_ready(joint_regressor_forward(feat, params, tm=8, tk=128))
    ref = jax.block_until_ready(joint_regressor_reference(feat, params))

    assert out.shape == (n, t, j, 3)
    # bf16 matmul inputs with f32 accumulation -> looser tolerance vs the f32 reference
    assert jnp.allclose(out, ref, rtol=2e-2, atol=1e-2), "kernel/reference mismatch"
    print("KERNEL_OK")
</pallas_src>

<mosaic_0001>
module attributes {stable_mosaic.version = 11 : i64} {
  func.func @joint_regressor_kernel(%arg0: i32, %arg1: i32, %arg2: memref<8x128xbf16, #tpu.memory_space<vmem>>, %arg3: memref<128x128xbf16, #tpu.memory_space<vmem>>, %arg4: memref<1x128xf32, #tpu.memory_space<vmem>>, %arg5: memref<128x128xbf16, #tpu.memory_space<vmem>>, %arg6: memref<1x128xf32, #tpu.memory_space<vmem>>, %arg7: memref<8x128xf32, #tpu.memory_space<vmem>>, %arg8: memref<8x128xf32, #tpu.memory_space<vmem>>) attributes {dimension_semantics = [#tpu.dimension_semantics<parallel>, #tpu.dimension_semantics<arbitrary>], iteration_bounds = array<i64: 2, 2>, scalar_prefetch = 0 : i64, scratch_operands = 1 : i64, tpu.core_type = #tpu.core_type<tc>, window_params = [{transform_indices = @transform_0, window_bounds = array<i64: 8, 128>}, {transform_indices = @transform_1, window_bounds = array<i64: 128, 128>}, {pipeline_mode = #tpu.pipeline_mode<synchronous>, transform_indices = @transform_2, window_bounds = array<i64: 1, 128>}, {pipeline_mode = #tpu.pipeline_mode<synchronous>, transform_indices = @transform_3, window_bounds = array<i64: 128, 128>}, {pipeline_mode = #tpu.pipeline_mode<synchronous>, transform_indices = @transform_4, window_bounds = array<i64: 1, 128>}, {transform_indices = @transform_5, window_bounds = array<i64: 8, 128>}]} {
    %c0_i32 = arith.constant 0 : i32
    %0 = arith.cmpi eq, %arg1, %c0_i32 : i32
    %1 = arith.extui %0 : i1 to i32
    %c0_i32_0 = arith.constant 0 : i32
    %2 = arith.cmpi ne, %1, %c0_i32_0 : i32
    scf.if %2 {
      %cst_9 = arith.constant 0.000000e+00 : f32
      %12 = vector.broadcast %cst_9 : f32 to vector<8x128xf32>
      %c0_10 = arith.constant 0 : index
      %c0_11 = arith.constant 0 : index
      %13 = vector.load %arg8[%c0_10, %c0_11] : memref<8x128xf32, #tpu.memory_space<vmem>>, vector<8x128xf32>
      tpu.vector_store %arg8[%c0_10, %c0_11], %12 {strides = array<i32>} : memref<8x128xf32, #tpu.memory_space<vmem>>, vector<8x128xf32>,
    } else {
    }
    %c0 = arith.constant 0 : index
    %c0_1 = arith.constant 0 : index
    %3 = vector.load %arg8[%c0, %c0_1] : memref<8x128xf32, #tpu.memory_space<vmem>>, vector<8x128xf32>
    %c0_2 = arith.constant 0 : index
    %c0_3 = arith.constant 0 : index
    %4 = vector.load %arg2[%c0_2, %c0_3] : memref<8x128xbf16, #tpu.memory_space<vmem>>, vector<8x128xbf16>
    %c0_4 = arith.constant 0 : index
    %c0_5 = arith.constant 0 : index
    %5 = vector.load %arg3[%c0_4, %c0_5] : memref<128x128xbf16, #tpu.memory_space<vmem>>, vector<128x128xbf16>
    %cst = arith.constant dense<0.000000e+00> : vector<8x128xf32>
    %6 = tpu.matmul %4, %5, %cst {dimension_numbers = #tpu.dot_dimension_numbers<[1], [0], [0], [1], [0, 0, 1, 1], [], []>} : vector<8x128xbf16>, vector<128x128xbf16>, vector<8x128xf32> -> vector<8x128xf32>
    %7 = arith.addf %3, %6 : vector<8x128xf32>
    %c0_6 = arith.constant 0 : index
    %c0_7 = arith.constant 0 : index
    %8 = vector.load %arg8[%c0_6, %c0_7] : memref<8x128xf32, #tpu.memory_space<vmem>>, vector<8x128xf32>
    tpu.vector_store %arg8[%c0_6, %c0_7], %7 {strides = array<i32>} : memref<8x128xf32, #tpu.memory_space<vmem>>, vector<8x128xf32>,
    %c1_i32 = arith.constant 1 : i32
    %9 = arith.cmpi eq, %arg1, %c1_i32 : i32
    %10 = arith.extui %9 : i1 to i32
    %c0_i32_8 = arith.constant 0 : i32
    %11 = arith.cmpi ne, %10, %c0_i32_8 : i32
    scf.if %11 {
      %c0_9 = arith.constant 0 : index
      %c0_10 = arith.constant 0 : index
      %12 = vector.load %arg8[%c0_9, %c0_10] : memref<8x128xf32, #tpu.memory_space<vmem>>, vector<8x128xf32>
      %c0_11 = arith.constant 0 : index
      %c0_12 = arith.constant 0 : index
      %13 = vector.load %arg4[%c0_11, %c0_12] : memref<1x128xf32, #tpu.memory_space<vmem>>, vector<1x128xf32>
      %14 = vector.broadcast %13 : vector<1x128xf32> to vector<8x128xf32>
      %15 = arith.addf %12, %14 : vector<8x128xf32>
      %cst_13 = arith.constant 0.000000e+00 : f32
      %16 = vector.broadcast %cst_13 : f32 to vector<8x128xf32>
      %17 = arith.maximumf %15, %16 : vector<8x128xf32>
      %18 = arith.truncf %17 : vector<8x128xf32> to vector<8x128xbf16>
      %c0_14 = arith.constant 0 : index
      %c0_15 = arith.constant 0 : index
      %19 = vector.load %arg5[%c0_14, %c0_15] : memref<128x128xbf16, #tpu.memory_space<vmem>>, vector<128x128xbf16>
      %cst_16 = arith.constant dense<0.000000e+00> : vector<8x128xf32>
      %20 = tpu.matmul %18, %19, %cst_16 {dimension_numbers = #tpu.dot_dimension_numbers<[1], [0], [0], [1], [0, 0, 1, 1], [], []>} : vector<8x128xbf16>, vector<128x128xbf16>, vector<8x128xf32> -> vector<8x128xf32>
      %c0_17 = arith.constant 0 : index
      %c0_18 = arith.constant 0 : index
      %21 = vector.load %arg6[%c0_17, %c0_18] : memref<1x128xf32, #tpu.memory_space<vmem>>, vector<1x128xf32>
      %22 = vector.broadcast %21 : vector<1x128xf32> to vector<8x128xf32>
      %23 = arith.addf %20, %22 : vector<8x128xf32>
      %c0_19 = arith.constant 0 : index
      %c0_20 = arith.constant 0 : index
      %24 = vector.load %arg7[%c0_19, %c0_20] : memref<8x128xf32, #tpu.memory_space<vmem>>, vector<8x128xf32>
      tpu.vector_store %arg7[%c0_19, %c0_20], %23 {strides = array<i32>} : memref<8x128xf32, #tpu.memory_space<vmem>>, vector<8x128xf32>,
    } else {
    }
    return
  }
  func.func @transform_0(%arg0: i32, %arg1: i32) -> (i32, i32) {
    %c0_i32 = arith.constant 0 : i32
    return %arg0, %arg1 : i32, i32
  }
  func.func @transform_1(%arg0: i32, %arg1: i32) -> (i32, i32) {
    %c0_i32 = arith.constant 0 : i32
    %c0_i32_0 = arith.constant 0 : i32
    return %arg1, %c0_i32 : i32, i32
  }
  func.func @transform_2(%arg0: i32, %arg1: i32) -> (i32, i32) {
    %c0_i32 = arith.constant 0 : i32
    %c0_i32_0 = arith.constant 0 : i32
    %c0_i32_1 = arith.constant 0 : i32
    return %c0_i32, %c0_i32_0 : i32, i32
  }
  func.func @transform_3(%arg0: i32, %arg1: i32) -> (i32, i32) {
    %c0_i32 = arith.constant 0 : i32
    %c0_i32_0 = arith.constant 0 : i32
    %c0_i32_1 = arith.constant 0 : i32
    return %c0_i32, %c0_i32_0 : i32, i32
  }
  func.func @transform_4(%arg0: i32, %arg1: i32) -> (i32, i32) {
    %c0_i32 = arith.constant 0 : i32
    %c0_i32_0 = arith.constant 0 : i32
    %c0_i32_1 = arith.constant 0 : i32
    return %c0_i32, %c0_i32_0 : i32, i32
  }
  func.func @transform_5(%arg0: i32, %arg1: i32) -> (i32, i32) {
    %c0_i32 = arith.constant 0 : i32
    %c0_i32_0 = arith.constant 0 : i32
    return %arg0, %c0_i32 : i32, i32
  }
}

</mosaic_0001>

<llo_original>
// kernel: tpu_custom_call.1
$region0: #{tpu_custom_call.1}
  #allocation0 [shape = 'u32[]', space=smem, size = 0x4, offset = 0x4, fixed_abs, tag = 'smem constant byte address 0x4 - core index']
  #allocation1 [shape = 'u32[144,128]{1,0:T(1,128)}', space=vmem, size = 0x12000, scoped, tag = 'internal scratch']
  #allocation2 [shape = 'f32[8,128]{1,0:T(8,128)}', space=vmem, size = 0x1000, scoped, tag = 'scratch operand']
  %s0 = inlined_call_operand.hbm [shape: bf16[16,256], index: 0, kind: input, shape index: {}]
  %s1 = inlined_call_operand.hbm [shape: bf16[256,128], index: 1, kind: input, shape index: {}]
  %s2 = inlined_call_operand.vmem [shape: f32[1,128], index: 2, kind: input, shape index: {}]
  %s3 = inlined_call_operand.hbm [shape: bf16[128,128], index: 3, kind: input, shape index: {}]
  %s4 = inlined_call_operand.vmem [shape: f32[1,128], index: 4, kind: input, shape index: {}]
  %s5 = inlined_call_operand.hbm [shape: f32[16,128], index: 5, kind: output, shape index: {}]
  %s6 = sld [smem:[#allocation0]]
  $region73: #{tpu_custom_call.1} parent=0
    _
  %s8 = ssub.s32 1, %s6
  %s9 = scalar_select 0, %s8, %s6
  $region1: #{tpu_custom_call.1} parent=0
    #allocation3 [shape = 'u8[4096]{0}', space=vmem, size = 0x1000, scoped, tag = 'input window, operand 0']
    #allocation4 [shape = 's32[2]{0}', space=sflag, size = 0x8, scoped, tag = 'scoped memory for tpu_custom_call.1']
    #allocation5 [shape = 's32[2]{0}', space=sflag, size = 0x8, scoped, tag = 'scoped memory for tpu_custom_call.1']
    #allocation6 [shape = 'u8[65536]{0}', space=vmem, size = 0x10000, scoped, tag = 'input window, operand 1']
    #allocation7 [shape = 's32[2]{0}', space=sflag, size = 0x8, scoped, tag = 'scoped memory for tpu_custom_call.1']
    #allocation8 [shape = 'u8[32768]{0}', space=vmem, size = 0x8000, scoped, tag = 'input window, operand 3, single buffered']
    #allocation9 [shape = 'u8[8192]{0}', space=vmem, size = 0x2000, scoped, tag = 'output window, operand 0']
    %10 = vsyncpa [#allocation4], 0
    %s11 = scalar_lea.sflag [#allocation4], 1
    %12 = vsyncpa %s11, 0
    %13 = vsyncpa [#allocation7], 0
    %s14 = scalar_lea.sflag [#allocation7], 1
    %15 = vsyncpa %s14, 0
    %16 = vsyncpa [#allocation5], 0
    %s17 = scalar_lea.sflag [#allocation5], 1
    %18 = vsyncpa %s17, 0
    loop: start=0, step=1, limit=6
    $region2: #{tpu_custom_call.1} parent=1 // loop_pre_header
      _
    $region3: #{tpu_custom_call.1} parent=1 // loop_header
      %s20 = sphi 0, %s24
      %p21 = scmp.ge.s32.totalorder %s20, 6
      %s27 = sphi 0, %s39
      %s28 = sphi 0, %s35
      %s29 = sphi 0, %s27
      %s30 = sphi 0, %s28
      %s31 = sphi 0, %s29
      %s32 = sphi 0, %s30
      %s44 = sphi 0, %s46
      %s47 = sphi 0, %s44
      %s48 = sphi 0, %s47
      %s64 = sphi 0, %s48
      %s70 = sphi 0, %s72
      %s73 = sphi 0, %s70
      %s74 = sphi 0, %s73
      %s90 = sphi 0, %s74
      %s94 = sphi 0, %s94
      %s96 = sphi 0, %s94
      %s97 = sphi 0, %s96
      %s111 = sphi 0, %s97
      %s115 = sphi 0, %s115
      %s117 = sphi 0, %s115
      %s118 = sphi 0, %s117
      %s132 = sphi 0, %s118
      %s136 = sphi 0, %s136
      %s138 = sphi 0, %s136
      %s139 = sphi 0, %s138
      %s153 = sphi 0, %s139
      %s159 = sphi 0, %s161
      %s162 = sphi 0, %s159
      %s163 = sphi 0, %s162
      %s179 = sphi 0, %s163
    $region4: #{tpu_custom_call.1} parent=1 // loop_header_branch
      %23 = sbr.rel (%p21) target = $region8
    $region5: #{tpu_custom_call.1} parent=1 // loop_body
      %s25 = ssub.s32 %s20, 1
      %s26 = ssub.s32 %s20, 2
      %s33 = sadd.s32 1, %s28
      %p34 = scmp.ge.s32.totalorder %s33, 2
      %s35 = scalar_select %p34, 0, %s33
      %s36 = sadd.s32 1, %s27
      %s37 = scalar_select %p34, %s36, %s27
      %p38 = scmp.ge.s32.totalorder %s37, 2
      %s39 = scalar_select %p38, 0, %s37
      %s40 = ssub.s32 %s27, %s39
      %s41 = ssub.s32 %s28, %s35
      %s42 = sor.u32 %s40, %s41
      %p43 = scmp.eq.s32.totalorder %s42, 0
      %s45 = sadd.s32 %s44, 1
      %s46 = scalar_select %p43, %s44, %s45
      %p49 = pneg %p43
      %p50 = scmp.eq.s32.totalorder %s20, 3
      %p51 = por %p49, %p50
      %p52 = scmp.ne.s32.totalorder %s44, %s47
      %p53 = scmp.eq.s32.totalorder %s20, 0
      %p54 = por %p52, %p53
      %p55 = scmp.ne.s32.totalorder %s44, %s47
      %p56 = scmp.eq.s32.totalorder %s25, 3
      %p57 = por %p55, %p56
      %p58 = scmp.ne.s32.totalorder %s47, %s48
      %p59 = scmp.eq.s32.totalorder %s25, 0
      %p60 = por %p58, %p59
      %p61 = scmp.ne.s32.totalorder %s47, %s48
      %p62 = scmp.eq.s32.totalorder %s26, 3
      %p63 = por %p61, %p62
      %p65 = scmp.ne.s32.totalorder %s48, %s64
      %p66 = scmp.eq.s32.totalorder %s26, 0
      %p67 = por %p65, %p66
      %s68 = ssub.s32 %s28, %s35
      %p69 = scmp.eq.s32.totalorder %s68, 0
      %s71 = sadd.s32 %s70, 1
      %s72 = scalar_select %p69, %s70, %s71
      %p75 = pneg %p69
      %p76 = scmp.eq.s32.totalorder %s20, 3
      %p77 = por %p75, %p76
      %p78 = scmp.ne.s32.totalorder %s70, %s73
      %p79 = scmp.eq.s32.totalorder %s20, 0
      %p80 = por %p78, %p79
      %p81 = scmp.ne.s32.totalorder %s70, %s73
      %p82 = scmp.eq.s32.totalorder %s25, 3
      %p83 = por %p81, %p82
      %p84 = scmp.ne.s32.totalorder %s73, %s74
      %p85 = scmp.eq.s32.totalorder %s25, 0
      %p86 = por %p84, %p85
      %p87 = scmp.ne.s32.totalorder %s73, %s74
      %p88 = scmp.eq.s32.totalorder %s26, 3
      %p89 = por %p87, %p88
      %p91 = scmp.ne.s32.totalorder %s74, %s90
      %p92 = scmp.eq.s32.totalorder %s26, 0
      %p93 = por %p91, %p92
      %s95 = sadd.s32 %s94, 1
      %p98 = scmp.eq.s32.totalorder %s20, 3
      %p99 = scmp.ne.s32.totalorder %s94, %s96
      %p100 = scmp.eq.s32.totalorder %s20, 0
      %p101 = por %p99, %p100
      %p102 = scmp.ne.s32.totalorder %s94, %s96
      %p103 = scmp.eq.s32.totalorder %s25, 3
      %p104 = por %p102, %p103
      %p105 = scmp.ne.s32.totalorder %s96, %s97
      %p106 = scmp.eq.s32.totalorder %s25, 0
      %p107 = por %p105, %p106
      %p108 = scmp.ne.s32.totalorder %s96, %s97
      %p109 = scmp.eq.s32.totalorder %s26, 3
      %p110 = por %p108, %p109
      %p112 = scmp.ne.s32.totalorder %s97, %s111
      %p113 = scmp.eq.s32.totalorder %s26, 0
      %p114 = por %p112, %p113
      %s116 = sadd.s32 %s115, 1
      %p119 = scmp.eq.s32.totalorder %s20, 3
      %p120 = scmp.ne.s32.totalorder %s115, %s117
      %p121 = scmp.eq.s32.totalorder %s20, 0
      %p122 = por %p120, %p121
      %p123 = scmp.ne.s32.totalorder %s115, %s117
      %p124 = scmp.eq.s32.totalorder %s25, 3
      %p125 = por %p123, %p124
      %p126 = scmp.ne.s32.totalorder %s117, %s118
      %p127 = scmp.eq.s32.totalorder %s25, 0
      %p128 = por %p126, %p127
      %p129 = scmp.ne.s32.totalorder %s117, %s118
      %p130 = scmp.eq.s32.totalorder %s26, 3
      %p131 = por %p129, %p130
      %p133 = scmp.ne.s32.totalorder %s118, %s132
      %p134 = scmp.eq.s32.totalorder %s26, 0
      %p135 = por %p133, %p134
      %s137 = sadd.s32 %s136, 1
      %p140 = scmp.eq.s32.totalorder %s20, 3
      %p141 = scmp.ne.s32.totalorder %s136, %s138
      %p142 = scmp.eq.s32.totalorder %s20, 0
      %p143 = por %p141, %p142
      %p144 = scmp.ne.s32.totalorder %s136, %s138
      %p145 = scmp.eq.s32.totalorder %s25, 3
      %p146 = por %p144, %p145
      %p147 = scmp.ne.s32.totalorder %s138, %s139
      %p148 = scmp.eq.s32.totalorder %s25, 0
      %p149 = por %p147, %p148
      %p150 = scmp.ne.s32.totalorder %s138, %s139
      %p151 = scmp.eq.s32.totalorder %s26, 3
      %p152 = por %p150, %p151
      %p154 = scmp.ne.s32.totalorder %s139, %s153
      %p155 = scmp.eq.s32.totalorder %s26, 0
      %p156 = por %p154, %p155
      %s157 = ssub.s32 %s27, %s39
      %p158 = scmp.eq.s32.totalorder %s157, 0
      %s160 = sadd.s32 %s159, 1
      %s161 = scalar_select %p158, %s159, %s160
      %p164 = pneg %p158
      %p165 = scmp.eq.s32.totalorder %s20, 3
      %p166 = por %p164, %p165
      %p167 = scmp.ne.s32.totalorder %s159, %s162
      %p168 = scmp.eq.s32.totalorder %s20, 0
      %p169 = por %p167, %p168
      %p170 = scmp.ne.s32.totalorder %s159, %s162
      %p171 = scmp.eq.s32.totalorder %s25, 3
      %p172 = por %p170, %p171
      %p173 = scmp.ne.s32.totalorder %s162, %s163
      %p174 = scmp.eq.s32.totalorder %s25, 0
      %p175 = por %p173, %p174
      %p176 = scmp.ne.s32.totalorder %s162, %s163
      %p177 = scmp.eq.s32.totalorder %s26, 3
      %p178 = por %p176, %p177
      %p180 = scmp.ne.s32.totalorder %s163, %s179
      %p181 = scmp.eq.s32.totalorder %s26, 0
      %p182 = por %p180, %p181
      %p183 = scmp.le.s32.totalorder 1, %s20
      %p184 = scmp.lt.s32.totalorder %s20, 5
      %p185 = pnand %p183, %p184
      %p186 = pneg %p185
      // Predicated region
      $region9: #{tpu_custom_call.1} parent=5 // pred_check
        _
      $region10: #{tpu_custom_call.1} parent=5 // pred_check_branch
        %188 = sbr.rel (%p185) target = $region12
      $region11: #{tpu_custom_call.1} parent=5 // pred_region
        %s189 = ssub.s32 %s20, 1
        // Predicated region
        $region13: #{tpu_custom_call.1} parent=11 // pred_check
          %p190 = pneg %p107
        $region14: #{tpu_custom_call.1} parent=11 // pred_check_branch
          %192 = sbr.rel (%p190) target = $region16
        $region15: #{tpu_custom_call.1} parent=11 // pred_region
          _
        $region16: #{tpu_custom_call.1} parent=11 // pred_fallthru
          _
        // Predicated region
        $region17: #{tpu_custom_call.1} parent=11 // pred_check
          %p193 = pneg %p128
        $region18: #{tpu_custom_call.1} parent=11 // pred_check_branch
          %195 = sbr.rel (%p193) target = $region20
        $region19: #{tpu_custom_call.1} parent=11 // pred_region
          %s197 = ssub.s32 1024, 1024
          %198 = vsyncadd [#allocation7], %s197
          %s199 = sshll.u32 [#allocation8], 4
          %s200 = int_to_ptr.vmem [resolvable:$true] %s199
          %205 = dma.hbm_to_vmem [thread:$0]  %s3, 1024, %s200, [#allocation7], 64, 64, 4
        $region20: #{tpu_custom_call.1} parent=11 // pred_fallthru
          _
        // Predicated region
        $region21: #{tpu_custom_call.1} parent=11 // pred_check
          %p206 = pneg %p149
        $region22: #{tpu_custom_call.1} parent=11 // pred_check_branch
          %208 = sbr.rel (%p206) target = $region24
        $region23: #{tpu_custom_call.1} parent=11 // pred_region
          _
        $region24: #{tpu_custom_call.1} parent=11 // pred_fallthru
          _
      $region12: #{tpu_custom_call.1} parent=5 // pred_fallthru
        _
      %p209 = scmp.lt.s32.totalorder %s20, 4
      // Predicated region
      $region25: #{tpu_custom_call.1} parent=5 // pred_check
        %p210 = pneg %p209
      $region26: #{tpu_custom_call.1} parent=5 // pred_check_branch
        %212 = sbr.rel (%p210) target = $region28
      $region27: #{tpu_custom_call.1} parent=5 // pred_region
        // Predicated region
        $region29: #{tpu_custom_call.1} parent=27 // pred_check
          %p213 = pneg %p54
        $region30: #{tpu_custom_call.1} parent=27 // pred_check_branch
          %215 = sbr.rel (%p213) target = $region32
        $region31: #{tpu_custom_call.1} parent=27 // pred_region
          %s216 = sand.u32 %s44, 1
          %s217 = scalar_lea.sflag [#allocation4], %s216
          %s218 = sand.u32 %s44, 1
          %s219 = smul.addr %s218, 4
          %s220 = scalar_lea.vmem [#allocation3], %s219
          %s222 = ssub.s32 64, 64
          %223 = vsyncadd %s217, %s222
          %s224 = smul.addr %s27, 2
          %s225 = sadd.s32 %s28, %s224
          %s226 = smul.addr %s225, 64
          %s227 = scalar_lea.hbm %s0, %s226
          %s229 = sshll.u32 %s220, 4
          %s230 = int_to_ptr.vmem [resolvable:$true] %s229
          %232 = dma.hbm_to_vmem [thread:$0]  %s227, 64, %s230, %s217
        $region32: #{tpu_custom_call.1} parent=27 // pred_fallthru
          _
        // Predicated region
        $region33: #{tpu_custom_call.1} parent=27 // pred_check
          %p233 = pneg %p80
        $region34: #{tpu_custom_call.1} parent=27 // pred_check_branch
          %235 = sbr.rel (%p233) target = $region36
        $region35: #{tpu_custom_call.1} parent=27 // pred_region
          %s236 = sand.u32 %s20, 1
          %s237 = scalar_lea.sflag [#allocation7], %s236
          %s238 = sand.u32 %s70, 1
          %s239 = smul.addr %s238, 64
          %s240 = scalar_lea.vmem [#allocation6], %s239
          %s241 = smul.u32 16, %s28
          %s243 = ssub.s32 1024, 1024
          %244 = vsyncadd %s237, %s243
          %s245 = smul.addr %s241, 64
          %s246 = scalar_lea.hbm %s1, %s245
          %s247 = sshll.u32 %s240, 4
          %s248 = int_to_ptr.vmem [resolvable:$true] %s247
          %253 = dma.hbm_to_vmem [thread:$0]  %s246, 1024, %s248, %s237, 64, 64, 4
        $region36: #{tpu_custom_call.1} parent=27 // pred_fallthru
          _
      $region28: #{tpu_custom_call.1} parent=5 // pred_fallthru
        _
      %p254 = scmp.le.s32.totalorder 1, %s20
      %p255 = scmp.lt.s32.totalorder %s20, 5
      %p256 = pnand %p254, %p255
      %p257 = pneg %p256
      // Predicated region
      $region37: #{tpu_custom_call.1} parent=5 // pred_check
        _
      $region38: #{tpu_custom_call.1} parent=5 // pred_check_branch
        %259 = sbr.rel (%p256) target = $region40
      $region39: #{tpu_custom_call.1} parent=5 // pred_region
        %s260 = ssub.s32 %s20, 1
        %s261 = sand.u32 %s47, 1
        %s262 = scalar_lea.sflag [#allocation4], %s261
        %s263 = sand.u32 %s47, 1
        %s264 = smul.addr %s263, 4
        %s265 = scalar_lea.vmem [#allocation3], %s264
        // Predicated region
        $region41: #{tpu_custom_call.1} parent=39 // pred_check
          %p266 = pneg %p60
        $region42: #{tpu_custom_call.1} parent=39 // pred_check_branch
          %268 = sbr.rel (%p266) target = $region44
        $region43: #{tpu_custom_call.1} parent=39 // pred_region
          %269 = dma.done %s262, 64
        $region44: #{tpu_custom_call.1} parent=39 // pred_fallthru
          _
        %s270 = sand.u32 %s25, 1
        %s271 = scalar_lea.sflag [#allocation7], %s270
        %s272 = sand.u32 %s73, 1
        %s273 = smul.addr %s272, 64
        %s274 = scalar_lea.vmem [#allocation6], %s273
        // Predicated region
        $region45: #{tpu_custom_call.1} parent=39 // pred_check
          %p275 = pneg %p86
        $region46: #{tpu_custom_call.1} parent=39 // pred_check_branch
          %277 = sbr.rel (%p275) target = $region48
        $region47: #{tpu_custom_call.1} parent=39 // pred_region
          %278 = dma.done %s271, 1024
        $region48: #{tpu_custom_call.1} parent=39 // pred_fallthru
          _
        // Predicated region
        $region49: #{tpu_custom_call.1} parent=39 // pred_check
          %p279 = pneg %p128
        $region50: #{tpu_custom_call.1} parent=39 // pred_check_branch
          %281 = sbr.rel (%p279) target = $region52
        $region51: #{tpu_custom_call.1} parent=39 // pred_region
          %282 = dma.done [#allocation7], 1024
        $region52: #{tpu_custom_call.1} parent=39 // pred_fallthru
          _
        %s283 = sand.u32 %s47, 1
        %s284 = scalar_lea.sflag [#allocation4], %s283
        %s285 = sand.u32 %s47, 1
        %s286 = smul.addr %s285, 4
        %s287 = scalar_lea.vmem [#allocation3], %s286
        %p288 = pneg %p60
        %p289 = pneg %p57
        %s290 = sand.u32 %s25, 1
        %s291 = scalar_lea.sflag [#allocation7], %s290
        %s292 = sand.u32 %s73, 1
        %s293 = smul.addr %s292, 64
        %s294 = scalar_lea.vmem [#allocation6], %s293
        %p295 = pneg %p86
        %p296 = pneg %p83
        %p297 = pneg %p107
        %p298 = pneg %p104
        %p299 = pneg %p128
        %p300 = pneg %p125
        %p301 = pneg %p149
        %p302 = pneg %p146
        %p303 = pneg %p175
        %p304 = pneg %p172
        %s305 = sand.u32 %s162, 1
        %s306 = scalar_lea.sflag [#allocation5], %s305
        %s307 = sand.u32 %s162, 1
        %s308 = smul.addr %s307, 8
        %s309 = scalar_lea.vmem [#allocation9], %s308
        %s310 = smul.u32 16, %s30
        %p312 = scmp.eq.s32.totalorder %s30, 0
        // Predicated region
        $region53: #{tpu_custom_call.1} parent=39 // pred_check
          %p313 = pneg %p312
        $region54: #{tpu_custom_call.1} parent=39 // pred_check_branch
          %315 = sbr.rel (%p313) target = $region56
        $region55: #{tpu_custom_call.1} parent=39 // pred_region
          %316 = vst [vmem:[#allocation2] sm:$0xff] 0.0
        $region56: #{tpu_custom_call.1} parent=39 // pred_fallthru
          _
        %v317 = vld [vmem:[#allocation2] sm:$0xff]
        %v318 = vld [vmem:[%s265] sm:$0xf]
        %v319 = vld [vmem:[%s274] sm:$0xf]
        %v320 = vld [vmem:[%s274 + $0x4] sm:$0xf]
        %v321 = vld [vmem:[%s274 + $0x8] sm:$0xf]
        %v322 = vld [vmem:[%s274 + $0xc] sm:$0xf]
        %v323 = vld [vmem:[%s274 + $0x10] sm:$0xf]
        %v324 = vld [vmem:[%s274 + $0x14] sm:$0xf]
        %v325 = vld [vmem:[%s274 + $0x18] sm:$0xf]
        %v326 = vld [vmem:[%s274 + $0x1c] sm:$0xf]
        %v327 = vld [vmem:[%s274 + $0x20] sm:$0xf]
        %v328 = vld [vmem:[%s274 + $0x24] sm:$0xf]
        %v329 = vld [vmem:[%s274 + $0x28] sm:$0xf]
        %v330 = vld [vmem:[%s274 + $0x2c] sm:$0xf]
        %v331 = vld [vmem:[%s274 + $0x30] sm:$0xf]
        %v332 = vld [vmem:[%s274 + $0x34] sm:$0xf]
        %v333 = vld [vmem:[%s274 + $0x38] sm:$0xf]
        %v334 = vld [vmem:[%s274 + $0x3c] sm:$0xf]
        %v351 = vunpack.c.l.b16 %v319
        %v352 = vunpack.c.l.b16 %v320
        %v353 = vunpack.c.l.b16 %v321
        %v354 = vunpack.c.l.b16 %v322
        %v355 = vunpack.c.l.b16 %v323
        %v356 = vunpack.c.l.b16 %v324
        %v357 = vunpack.c.l.b16 %v325
        %v358 = vunpack.c.l.b16 %v326
        %v359 = vunpack.c.l.b16 %v327
        %v360 = vunpack.c.l.b16 %v328
        %v361 = vunpack.c.l.b16 %v329
        %v362 = vunpack.c.l.b16 %v330
        %v363 = vunpack.c.l.b16 %v331
        %v364 = vunpack.c.l.b16 %v332
        %v365 = vunpack.c.l.b16 %v333
        %v366 = vunpack.c.l.b16 %v334
        %v367 = vpack.c.b16 %v352, %v351
        %v368 = vpack.c.b16 %v354, %v353
        %v369 = vpack.c.b16 %v356, %v355
        %v370 = vpack.c.b16 %v358, %v357
        %v371 = vpack.c.b16 %v360, %v359
        %v372 = vpack.c.b16 %v362, %v361
        %v373 = vpack.c.b16 %v364, %v363
        %v374 = vpack.c.b16 %v366, %v365
        %383 = vmatprep.subr.bf16.mxu0 0
        %384 = vmatpush1.bf16.msra.mxu0 %v374
        %385 = vmatprep.subr.bf16.mxu0 0
        %386 = vmatpush1.bf16.msra.mxu0 %v373
        %387 = vmatprep.subr.bf16.mxu0 0
        %388 = vmatpush1.bf16.msra.mxu0 %v372
        %389 = vmatprep.subr.bf16.mxu0 0
        %390 = vmatpush1.bf16.msra.mxu0 %v371
        %391 = vmatprep.subr.bf16.mxu0 0
        %392 = vmatpush1.bf16.msra.mxu0 %v370
        %393 = vmatprep.subr.bf16.mxu0 0
        %394 = vmatpush1.bf16.msra.mxu0 %v369
        %395 = vmatprep.subr.bf16.mxu0 0
        %396 = vmatpush1.bf16.msra.mxu0 %v368
        %397 = vmatprep.subr.bf16.mxu0 0
        %398 = vmatpush1.bf16.msra.mxu0 %v367
        %399 = vmatprep.subr.bf16.mxu0 0
        %400 = vmatpush2.bf16.msra.mxu0 0
        %401 = vmatprep.subr.bf16.mxu0 0
        %402 = vmatpush2.bf16.msra.mxu0 0
        %403 = vmatprep.subr.bf16.mxu0 0
        %404 = vmatpush2.bf16.msra.mxu0 0
        %405 = vmatprep.subr.bf16.mxu0 0
        %406 = vmatpush2.bf16.msra.mxu0 0
        %407 = vmatprep.subr.bf16.mxu0 0
        %408 = vmatpush2.bf16.msra.mxu0 0
        %409 = vmatprep.subr.bf16.mxu0 0
        %410 = vmatpush2.bf16.msra.mxu0 0
        %411 = vmatprep.subr.bf16.mxu0 0
        %412 = vmatpush2.bf16.msra.mxu0 0
        %413 = vmatprep.subr.bf16.mxu0 0
        %414 = vmatpush2.bf16.msra.mxu0 0
        %415 = vmatprep.mubr.bf16.mxu0 0
        %416 = vmatmul.mubr.bf16.gmra.mxu0 %v318
        %v417 = vpop.f32.mrf.mxu0
        %v418 = vadd.f32 0.0, %v417
        %v419 = vpop.f32.mrf.mxu0
        %v420 = vpop.f32.mrf.mxu0
        %v421 = vpop.f32.mrf.mxu0
        %422 = vdwg.mxu0
        %v423 = vadd.f32 %v317, %v418
        %424 = vst [vmem:[#allocation2] sm:$0xff] %v423
        %p425 = scmp.eq.s32.totalorder %s30, 1
        // Predicated region
        $region57: #{tpu_custom_call.1} parent=39 // pred_check
          %p426 = pneg %p425
        $region58: #{tpu_custom_call.1} parent=39 // pred_check_branch
          %428 = sbr.rel (%p426) target = $region60
        $region59: #{tpu_custom_call.1} parent=39 // pred_region
          %v429 = vld [vmem:[#allocation2] sm:$0xff]
          %v430 = vld [vmem:[%s2] sm:$0x1]
          %v432 = vlaneseq
          %v433 = vshrl.u32 %v432, 7
          %v434 = vsub.s32 0, %v433
          %v435 = vrot.slane %v430, %v434
          %v437 = vadd.f32 %v429, %v435
          %v438 = vmax.f32 %v437, 0.0
          %v439 = vpack.c.bf16 %v438, %v438
          %v440 = vld [vmem:[#allocation8] sm:$0xf]
          %v441 = vld [vmem:[#allocation8 + $0x4] sm:$0xf]
          %v442 = vld [vmem:[#allocation8 + $0x8] sm:$0xf]
          %v443 = vld [vmem:[#allocation8 + $0xc] sm:$0xf]
          %v444 = vld [vmem:[#allocation8 + $0x10] sm:$0xf]
          %v445 = vld [vmem:[#allocation8 + $0x14] sm:$0xf]
          %v446 = vld [vmem:[#allocation8 + $0x18] sm:$0xf]
          %v447 = vld [vmem:[#allocation8 + $0x1c] sm:$0xf]
          %v448 = vld [vmem:[#allocation8 + $0x20] sm:$0xf]
          %v449 = vld [vmem:[#allocation8 + $0x24] sm:$0xf]
          %v450 = vld [vmem:[#allocation8 + $0x28] sm:$0xf]
          %v451 = vld [vmem:[#allocation8 + $0x2c] sm:$0xf]
          %v452 = vld [vmem:[#allocation8 + $0x30] sm:$0xf]
          %v453 = vld [vmem:[#allocation8 + $0x34] sm:$0xf]
          %v454 = vld [vmem:[#allocation8 + $0x38] sm:$0xf]
          %v455 = vld [vmem:[#allocation8 + $0x3c] sm:$0xf]
          %v456 = vld [vmem:[%s4] sm:$0x1]
          %v458 = vlaneseq
          %v459 = vshrl.u32 %v458, 7
          %v460 = vsub.s32 0, %v459
          %v461 = vrot.slane %v456, %v460
          %v479 = vunpack.c.l.b16 %v440
          %v480 = vunpack.c.l.b16 %v441
          %v481 = vunpack.c.l.b16 %v442
          %v482 = vunpack.c.l.b16 %v443
          %v483 = vunpack.c.l.b16 %v444
          %v484 = vunpack.c.l.b16 %v445
          %v485 = vunpack.c.l.b16 %v446
          %v486 = vunpack.c.l.b16 %v447
          %v487 = vunpack.c.l.b16 %v448
          %v488 = vunpack.c.l.b16 %v449
          %v489 = vunpack.c.l.b16 %v450
          %v490 = vunpack.c.l.b16 %v451
          %v491 = vunpack.c.l.b16 %v452
          %v492 = vunpack.c.l.b16 %v453
          %v493 = vunpack.c.l.b16 %v454
          %v494 = vunpack.c.l.b16 %v455
          %v495 = vpack.c.b16 %v480, %v479
          %v496 = vpack.c.b16 %v482, %v481
          %v497 = vpack.c.b16 %v484, %v483
          %v498 = vpack.c.b16 %v486, %v485
          %v499 = vpack.c.b16 %v488, %v487
          %v500 = vpack.c.b16 %v490, %v489
          %v501 = vpack.c.b16 %v492, %v491
          %v502 = vpack.c.b16 %v494, %v493
          %511 = vmatprep.subr.bf16.mxu0 0
          %512 = vmatpush1.bf16.msra.mxu0 %v502
          %513 = vmatprep.subr.bf16.mxu0 0
          %514 = vmatpush1.bf16.msra.mxu0 %v501
          %515 = vmatprep.subr.bf16.mxu0 0
          %516 = vmatpush1.bf16.msra.mxu0 %v500
          %517 = vmatprep.subr.bf16.mxu0 0
          %518 = vmatpush1.bf16.msra.mxu0 %v499
          %519 = vmatprep.subr.bf16.mxu0 0
          %520 = vmatpush1.bf16.msra.mxu0 %v498
          %521 = vmatprep.subr.bf16.mxu0 0
          %522 = vmatpush1.bf16.msra.mxu0 %v497
          %523 = vmatprep.subr.bf16.mxu0 0
          %524 = vmatpush1.bf16.msra.mxu0 %v496
          %525 = vmatprep.subr.bf16.mxu0 0
          %526 = vmatpush1.bf16.msra.mxu0 %v495
          %527 = vmatprep.subr.bf16.mxu0 0
          %528 = vmatpush2.bf16.msra.mxu0 0
          %529 = vmatprep.subr.bf16.mxu0 0
          %530 = vmatpush2.bf16.msra.mxu0 0
          %531 = vmatprep.subr.bf16.mxu0 0
          %532 = vmatpush2.bf16.msra.mxu0 0
          %533 = vmatprep.subr.bf16.mxu0 0
          %534 = vmatpush2.bf16.msra.mxu0 0
          %535 = vmatprep.subr.bf16.mxu0 0
          %536 = vmatpush2.bf16.msra.mxu0 0
          %537 = vmatprep.subr.bf16.mxu0 0
          %538 = vmatpush2.bf16.msra.mxu0 0
          %539 = vmatprep.subr.bf16.mxu0 0
          %540 = vmatpush2.bf16.msra.mxu0 0
          %541 = vmatprep.subr.bf16.mxu0 0
          %542 = vmatpush2.bf16.msra.mxu0 0
          %543 = vmatprep.mubr.bf16.mxu0 0
          %544 = vmatmul.mubr.bf16.gmra.mxu0 %v439
          %v545 = vpop.f32.mrf.mxu0
          %v546 = vadd.f32 %v461, %v545
          %v547 = vpop.f32.mrf.mxu0
          %v548 = vpop.f32.mrf.mxu0
          %v549 = vpop.f32.mrf.mxu0
          %550 = vdwg.mxu0
          %551 = vst [vmem:[%s309] sm:$0xff] %v546
        $region60: #{tpu_custom_call.1} parent=39 // pred_fallthru
          _
        %s552 = sand.u32 %s162, 1
        %s553 = scalar_lea.sflag [#allocation5], %s552
        %s554 = sand.u32 %s162, 1
        %s555 = smul.addr %s554, 8
        %s556 = scalar_lea.vmem [#allocation9], %s555
        // Predicated region
        $region61: #{tpu_custom_call.1} parent=39 // pred_check
          %p557 = pneg %p172
        $region62: #{tpu_custom_call.1} parent=39 // pred_check_branch
          %559 = sbr.rel (%p557) target = $region64
        $region63: #{tpu_custom_call.1} parent=39 // pred_region
          %s561 = ssub.s32 128, 128
          %562 = vsyncadd %s553, %s561
          %s563 = smul.addr %s29, 128
          %s564 = scalar_lea.hbm %s5, %s563
          %s566 = sshll.u32 %s556, 4
          %s567 = int_to_ptr.vmem [resolvable:$true] %s566
          %569 = dma.vmem_to_hbm [thread:$0]  %s567, 128, %s564, %s553
        $region64: #{tpu_custom_call.1} parent=39 // pred_fallthru
          _
      $region40: #{tpu_custom_call.1} parent=5 // pred_fallthru
        _
      %p570 = scmp.le.s32.totalorder 2, %s20
      // Predicated region
      $region65: #{tpu_custom_call.1} parent=5 // pred_check
        %p571 = pneg %p570
      $region66: #{tpu_custom_call.1} parent=5 // pred_check_branch
        %573 = sbr.rel (%p571) target = $region68
      $region67: #{tpu_custom_call.1} parent=5 // pred_region
        %s574 = ssub.s32 %s20, 2
        // Predicated region
        $region69: #{tpu_custom_call.1} parent=67 // pred_check
          %p575 = pneg %p178
        $region70: #{tpu_custom_call.1} parent=67 // pred_check_branch
          %577 = sbr.rel (%p575) target = $region72
        $region71: #{tpu_custom_call.1} parent=67 // pred_region
          %s578 = sand.u32 %s163, 1
          %s579 = scalar_lea.sflag [#allocation5], %s578
          %s580 = sand.u32 %s163, 1
          %s581 = smul.addr %s580, 8
          %s582 = scalar_lea.vmem [#allocation9], %s581
          %583 = dma.done %s579, 128
        $region72: #{tpu_custom_call.1} parent=67 // pred_fallthru
          _
      $region68: #{tpu_custom_call.1} parent=5 // pred_fallthru
        _
    $region6: #{tpu_custom_call.1} parent=1 // loop_footer
      %s24 = sadd.s32 1, %s20
    $region7: #{tpu_custom_call.1} parent=1 // loop_footer_branch
      %19 = sbr.rel target = $region3
    $region8: #{tpu_custom_call.1} parent=1 // loop_exit
      _
    %584 = vsyncpa [#allocation4], 1
    %s585 = scalar_lea.sflag [#allocation4], 1
    %586 = vsyncpa %s585, 1
    %587 = vsyncpa [#allocation7], 1
    %s588 = scalar_lea.sflag [#allocation7], 1
    %589 = vsyncpa %s588, 1
    %590 = vsyncpa [#allocation5], 1
    %s591 = scalar_lea.sflag [#allocation5], 1
    %592 = vsyncpa %s591, 1

</llo_original>
